<compile_context>
chip_gen: v6e
topology: v6e:2x2x1
jax: 0.10.0
libtpu: 0.0.40
codegen_flags: <defaults>
</compile_context>

<pallas_src>
import functools

import jax
import jax.numpy as jnp
from jax.experimental import pallas as pl
from jax.experimental.pallas import tpu as pltpu

_EPS = 1e-5                  # torch.nn.LayerNorm default eps
_LANE = 128                  # TPU lane width
_SUBLANE = 8                 # TPU sublane width
_DEFAULT_TILE_N = 1024       # rows per grid step (clamped by VMEM budget)
_VMEM_TARGET = 48 * 1024 * 1024   # resident-footprint target (safe on v7x)
_VMEM_CAP = 64 * 1024 * 1024      # never request more than v7x physical VMEM


def _round_up(x, m):
    return ((x + m - 1) // m) * m


# ----------------------------------------------------------------------------
# Fused kernel builder: x -> [Linear+LN+ReLU]*(layer_num-1) -> Linear
# ----------------------------------------------------------------------------
def _make_fused_kernel(layer_num, real_channels):
    n_hidden = layer_num - 1

    def kernel(x_ref, *refs):
        out_ref = refs[-1]
        params = refs[:-1]
        x = x_ref[...].astype(jnp.float32)
        pos = 0
        for idx in range(n_hidden):
            w_ref, b_ref, g_ref, beta_ref = params[pos:pos + 4]
            pos += 4
            h_real = real_channels[idx + 1]
            inv_h = 1.0 / float(h_real)
            # Linear (+bias). Padded weight columns / bias lanes are zero, so
            # y is exactly zero in padded lanes.
            y = jnp.dot(x, w_ref[...], preferred_element_type=jnp.float32) + b_ref[...]
            # One-pass LayerNorm statistics over the REAL width.  Padded lanes
            # contribute nothing to either sum; the two reductions are
            # independent so they overlap on the XLU.
            s1 = jnp.sum(y, axis=-1, keepdims=True)
            s2 = jnp.sum(y * y, axis=-1, keepdims=True)
            mean = s1 * inv_h
            var = s2 * inv_h - mean * mean          # biased var, matches torch
            yn = (y - mean) * jax.lax.rsqrt(var + _EPS)   # EUP rsqrt
            # gamma/beta are zero in padded lanes -> padded lanes stay 0.
            yn = yn * g_ref[...] + beta_ref[...]
            x = jnp.maximum(yn, 0.0)                # ReLU
        # Final bare Linear straight into the unpadded output block.
        w_ref, b_ref = params[pos:pos + 2]
        out_ref[...] = (
            jnp.dot(x, w_ref[...], preferred_element_type=jnp.float32) + b_ref[...]
        )

    return kernel


# ----------------------------------------------------------------------------
# Parameter init (mirrors the module's layer shapes)
# ----------------------------------------------------------------------------
def init_classify_decoder(key, node_embed_dim, num_classes=2, layer_num=1):
    channels = [node_embed_dim] + [node_embed_dim // 4] * (layer_num - 1) + [num_classes]
    params = []
    for idx in range(layer_num):
        cin, cout = channels[idx], channels[idx + 1]
        key, kw, kb = jax.random.split(key, 3)
        w = jax.random.normal(kw, (cin, cout), jnp.float32) * 0.05   # (in, out)
        b = jax.random.normal(kb, (1, cout), jnp.float32) * 0.01
        gamma = jnp.ones((1, cout), jnp.float32)    # LayerNorm weight
        beta = jnp.zeros((1, cout), jnp.float32)    # LayerNorm bias
        params.append((w, b, gamma, beta))
    return params


# ----------------------------------------------------------------------------
# Forward: one fused pallas_call over a row-tiled grid
# ----------------------------------------------------------------------------
def classify_decoder_forward(params, decoder_input, layer_num, tile_n=_DEFAULT_TILE_N):
    x = decoder_input.astype(jnp.float32)
    if layer_num == 0:
        return x  # nn.Identity

    n, d = x.shape
    real_channels = [d] + [params[i][0].shape[1] for i in range(layer_num)]
    num_classes = real_channels[-1]

    # K of the first matmul only needs sublane (8) alignment; hidden widths are
    # lane-padded to 128 (lane-dense intermediates, VMEM-only so no HBM cost);
    # the output keeps its real width (tiny HBM writeback for small classes).
    padded_channels = [_round_up(d, _SUBLANE)]
    padded_channels += [_round_up(c, _LANE) for c in real_channels[1:-1]]
    padded_channels += [num_classes]
    d_p = padded_channels[0]

    if d_p != d:
        x = jnp.pad(x, ((0, 0), (0, d_p - d)))

    # Zero-pad params.  Invariant (required by the mask-free LayerNorm): padded
    # weight columns/rows, bias, gamma and beta are all exactly zero.
    flat_params = []
    for idx in range(layer_num):
        w, b, g, beta = params[idx]
        cin_p, cout_p = padded_channels[idx], padded_channels[idx + 1]
        wp = jnp.zeros((cin_p, cout_p), jnp.float32).at[: w.shape[0], : w.shape[1]].set(w)
        bp = jnp.zeros((1, cout_p), jnp.float32).at[:, : b.shape[1]].set(b)
        if idx < layer_num - 1:
            gp = jnp.zeros((1, cout_p), jnp.float32).at[:, : g.shape[1]].set(g)
            betap = jnp.zeros((1, cout_p), jnp.float32).at[:, : beta.shape[1]].set(beta)
            flat_params += [wp, bp, gp, betap]
        else:
            flat_params += [wp, bp]

    # ---- Row-tile sizing from an explicit VMEM budget ------------------------
    param_bytes = sum(4 * p.size for p in flat_params)   # Buffered(1): one copy each
    max_act = max(padded_channels)                        # widest live activation
    # x double-buffered + out double-buffered + ~3 f32 copies of the widest
    # intermediate for compiler scratch.
    per_row_bytes = 4 * (2 * d_p + 2 * num_classes + 3 * max_act)
    avail = _VMEM_TARGET - param_bytes - (2 << 20)
    max_tile = max(_SUBLANE, (avail // max(per_row_bytes, 1)) // _SUBLANE * _SUBLANE)
    tile_n = min(int(tile_n), int(max_tile))

    if n <= tile_n:
        if n >= 2 * _SUBLANE:
            # Keep >= 2 grid steps so both v7x TensorCores get work.
            tile_n = _round_up(-(-n // 2), _SUBLANE)
        else:
            tile_n = n
    else:
        tile_n = max(_SUBLANE, (tile_n // _SUBLANE) * _SUBLANE)

    grid = (pl.cdiv(n, tile_n),)

    # ---- Specs ----------------------------------------------------------------
    in_specs = [pl.BlockSpec((tile_n, d_p), lambda i: (i, 0))]
    for p in flat_params:  # constant block index -> resident, single-buffered
        in_specs.append(
            pl.BlockSpec(p.shape, lambda i: (0, 0), pipeline_mode=pl.Buffered(1))
        )
    out_specs = pl.BlockSpec((tile_n, num_classes), lambda i: (i, 0))

    # ---- Explicit VMEM limit (scoped default is 16/32 MiB; physical >= 64) ----
    needed = (
        param_bytes
        + 2 * 4 * tile_n * d_p
        + 2 * 4 * tile_n * num_classes
        + 3 * 4 * tile_n * max_act
        + (4 << 20)            # headroom for compiler scratch / spills
    )
    vmem_limit = int(min(max(needed, 32 << 20), _VMEM_CAP))

    flops = 2 * n * sum(
        padded_channels[i] * padded_channels[i + 1] for i in range(layer_num)
    )
    bytes_accessed = 4 * (n * d_p + n * num_classes + sum(p.size for p in flat_params))
    transcendentals = n * max(layer_num - 1, 0)

    kernel = _make_fused_kernel(layer_num, real_channels)
    out = pl.pallas_call(
        kernel,
        out_shape=jax.ShapeDtypeStruct((n, num_classes), jnp.float32),
        grid=grid,
        in_specs=in_specs,
        out_specs=out_specs,
        compiler_params=pltpu.CompilerParams(
            dimension_semantics=("parallel",),
            vmem_limit_bytes=vmem_limit,
        ),
        cost_estimate=pl.CostEstimate(
            flops=flops,
            transcendentals=transcendentals,
            bytes_accessed=bytes_accessed,
        ),
    )(x, *flat_params)
    return out


# ----------------------------------------------------------------------------
# Pure-JAX reference for correctness checking.
# ----------------------------------------------------------------------------
def classify_decoder_reference(params, decoder_input, layer_num):
    x = decoder_input.astype(jnp.float32)
    if layer_num == 0:
        return x
    for idx in range(layer_num):
        w, b, gamma, beta = params[idx]
        y = x @ w + b
        if idx < layer_num - 1:
            mean = jnp.mean(y, axis=-1, keepdims=True)
            var = jnp.mean((y - mean) ** 2, axis=-1, keepdims=True)
            y = (y - mean) / jnp.sqrt(var + _EPS) * gamma + beta
            y = jnp.maximum(y, 0.0)
        x = y
    return x


# ----------------------------------------------------------------------------
if __name__ == "__main__":
    key = jax.random.PRNGKey(0)

    N = 24                # small batch; exercises multi-step and 2-step grids
    node_embed_dim = 32
    num_classes = 2

    k_in, k_params = jax.random.split(key)
    decoder_input = jax.random.normal(k_in, (N, node_embed_dim), jnp.float32)

    for layer_num in (1, 2):   # bare-Linear path and fused Linear+LN+ReLU path
        params = init_classify_decoder(k_params, node_embed_dim, num_classes, layer_num)
        ref = classify_decoder_reference(params, decoder_input, layer_num)

        # (a) small explicit tile -> grid of 3 steps (partial last tile covered)
        fwd_small = jax.jit(
            functools.partial(classify_decoder_forward, layer_num=layer_num, tile_n=8)
        )
        out_small = jax.block_until_ready(fwd_small(params, decoder_input))
        assert out_small.shape == (N, num_classes), out_small.shape
        assert jnp.allclose(out_small, ref, atol=1e-5, rtol=1e-5), (
            f"mismatch vs reference (layer_num={layer_num}, tile=8)"
        )

        # (b) default tile -> auto-split into 2 grid steps (v7x two-TC path)
        fwd_default = jax.jit(
            functools.partial(classify_decoder_forward, layer_num=layer_num)
        )
        out_default = jax.block_until_ready(fwd_default(params, decoder_input))
        assert out_default.shape == (N, num_classes), out_default.shape
        assert jnp.allclose(out_default, ref, atol=1e-5, rtol=1e-5), (
            f"mismatch vs reference (layer_num={layer_num}, default tile)"
        )

    print("KERNEL_OK")
</pallas_src>

<mosaic_0001>
module attributes {stable_mosaic.version = 11 : i64} {
  func.func @kernel(%arg0: i32, %arg1: memref<8x32xf32, #tpu.memory_space<vmem>>, %arg2: memref<32x2xf32, #tpu.memory_space<vmem>>, %arg3: memref<1x2xf32, #tpu.memory_space<vmem>>, %arg4: memref<8x2xf32, #tpu.memory_space<vmem>>) attributes {dimension_semantics = [#tpu.dimension_semantics<parallel>], iteration_bounds = array<i64: 3>, scalar_prefetch = 0 : i64, scratch_operands = 0 : i64, tpu.core_type = #tpu.core_type<tc>, window_params = [{transform_indices = @transform_0, window_bounds = array<i64: 8, 32>}, {pipeline_mode = #tpu.pipeline_mode<synchronous>, transform_indices = @transform_1, window_bounds = array<i64: 32, 2>}, {pipeline_mode = #tpu.pipeline_mode<synchronous>, transform_indices = @transform_2, window_bounds = array<i64: 1, 2>}, {transform_indices = @transform_3, window_bounds = array<i64: 8, 2>}]} {
    %c0 = arith.constant 0 : index
    %c0_0 = arith.constant 0 : index
    %0 = vector.load %arg1[%c0, %c0_0] : memref<8x32xf32, #tpu.memory_space<vmem>>, vector<8x32xf32>
    %c0_1 = arith.constant 0 : index
    %c0_2 = arith.constant 0 : index
    %1 = vector.load %arg2[%c0_1, %c0_2] : memref<32x2xf32, #tpu.memory_space<vmem>>, vector<32x2xf32>
    %cst = arith.constant dense<0.000000e+00> : vector<8x2xf32>
    %2 = tpu.matmul %0, %1, %cst {dimension_numbers = #tpu.dot_dimension_numbers<[1], [0], [0], [1], [0, 0, 1, 1], [], []>} : vector<8x32xf32>, vector<32x2xf32>, vector<8x2xf32> -> vector<8x2xf32>
    %c0_3 = arith.constant 0 : index
    %c0_4 = arith.constant 0 : index
    %3 = vector.load %arg3[%c0_3, %c0_4] : memref<1x2xf32, #tpu.memory_space<vmem>>, vector<1x2xf32>
    %4 = vector.broadcast %3 : vector<1x2xf32> to vector<8x2xf32>
    %5 = arith.addf %2, %4 : vector<8x2xf32>
    %c0_5 = arith.constant 0 : index
    %c0_6 = arith.constant 0 : index
    %6 = vector.load %arg4[%c0_5, %c0_6] : memref<8x2xf32, #tpu.memory_space<vmem>>, vector<8x2xf32>
    tpu.vector_store %arg4[%c0_5, %c0_6], %5 {strides = array<i32>} : memref<8x2xf32, #tpu.memory_space<vmem>>, vector<8x2xf32>,
    return
  }
  func.func @transform_0(%arg0: i32) -> (i32, i32) {
    %c0_i32 = arith.constant 0 : i32
    %c0_i32_0 = arith.constant 0 : i32
    return %arg0, %c0_i32 : i32, i32
  }
  func.func @transform_1(%arg0: i32) -> (i32, i32) {
    %c0_i32 = arith.constant 0 : i32
    %c0_i32_0 = arith.constant 0 : i32
    %c0_i32_1 = arith.constant 0 : i32
    return %c0_i32, %c0_i32_0 : i32, i32
  }
  func.func @transform_2(%arg0: i32) -> (i32, i32) {
    %c0_i32 = arith.constant 0 : i32
    %c0_i32_0 = arith.constant 0 : i32
    %c0_i32_1 = arith.constant 0 : i32
    return %c0_i32, %c0_i32_0 : i32, i32
  }
  func.func @transform_3(%arg0: i32) -> (i32, i32) {
    %c0_i32 = arith.constant 0 : i32
    %c0_i32_0 = arith.constant 0 : i32
    return %arg0, %c0_i32 : i32, i32
  }
}

</mosaic_0001>

<llo_original>
// kernel: classify_decoder_forward.1
$region0: #{classify_decoder_forward.1}
  #allocation0 [shape = 'u32[]', space=smem, size = 0x4, offset = 0x4, fixed_abs, tag = 'smem constant byte address 0x4 - core index']
  #allocation1 [shape = 'u32[144,128]{1,0:T(1,128)}', space=vmem, size = 0x12000, scoped, tag = 'internal scratch']
  %s0 = inlined_call_operand.vmem [shape: f32[24,32], index: 0, kind: input, shape index: {}]
  %s1 = inlined_call_operand.vmem [shape: f32[32,2], index: 1, kind: input, shape index: {}]
  %s2 = inlined_call_operand.vmem [shape: f32[1,2], index: 2, kind: input, shape index: {}]
  %s3 = inlined_call_operand.vmem [shape: f32[24,2], index: 3, kind: output, shape index: {}]
  %s4 = sld [smem:[#allocation0]]
  $region45: #{classify_decoder_forward.1} parent=0
    _
  %s6 = ssub.s32 1, %s4
  %s7 = scalar_select 0, %s6, %s4
  loop: start=0, step=1, limit=5
  $region2: #{classify_decoder_forward.1} parent=0 // loop_pre_header
    _
  $region3: #{classify_decoder_forward.1} parent=0 // loop_header
    %s9 = sphi 0, %s13
    %p10 = scmp.ge.s32.totalorder %s9, 5
    %s19 = sphi 0, %s21
    %s22 = sphi 0, %s19
    %s23 = sphi 0, %s22
    %s39 = sphi 0, %s23
    %s43 = sphi 0, %s43
    %s45 = sphi 0, %s43
    %s46 = sphi 0, %s45
    %s60 = sphi 0, %s46
    %s64 = sphi 0, %s64
    %s66 = sphi 0, %s64
    %s67 = sphi 0, %s66
    %s81 = sphi 0, %s67
    %s87 = sphi 0, %s89
    %s90 = sphi 0, %s87
    %s91 = sphi 0, %s90
    %s107 = sphi 0, %s91
  $region4: #{classify_decoder_forward.1} parent=0 // loop_header_branch
    %12 = sbr.rel (%p10) target = $region8
  $region5: #{classify_decoder_forward.1} parent=0 // loop_body
    %s14 = ssub.s32 %s9, 1
    %s15 = ssub.s32 %s9, 2
    %s16 = sadd.s32 %s9, 1
    %s17 = ssub.s32 %s9, %s16
    %p18 = scmp.eq.s32.totalorder %s17, 0
    %s20 = sadd.s32 %s19, 1
    %s21 = scalar_select %p18, %s19, %s20
    %p24 = pneg %p18
    %p25 = scmp.eq.s32.totalorder %s9, 2
    %p26 = por %p24, %p25
    %p27 = scmp.ne.s32.totalorder %s19, %s22
    %p28 = scmp.eq.s32.totalorder %s9, 0
    %p29 = por %p27, %p28
    %p30 = scmp.ne.s32.totalorder %s19, %s22
    %p31 = scmp.eq.s32.totalorder %s14, 2
    %p32 = por %p30, %p31
    %p33 = scmp.ne.s32.totalorder %s22, %s23
    %p34 = scmp.eq.s32.totalorder %s14, 0
    %p35 = por %p33, %p34
    %p36 = scmp.ne.s32.totalorder %s22, %s23
    %p37 = scmp.eq.s32.totalorder %s15, 2
    %p38 = por %p36, %p37
    %p40 = scmp.ne.s32.totalorder %s23, %s39
    %p41 = scmp.eq.s32.totalorder %s15, 0
    %p42 = por %p40, %p41
    %s44 = sadd.s32 %s43, 1
    %p47 = scmp.eq.s32.totalorder %s9, 2
    %p48 = scmp.ne.s32.totalorder %s43, %s45
    %p49 = scmp.eq.s32.totalorder %s9, 0
    %p50 = por %p48, %p49
    %p51 = scmp.ne.s32.totalorder %s43, %s45
    %p52 = scmp.eq.s32.totalorder %s14, 2
    %p53 = por %p51, %p52
    %p54 = scmp.ne.s32.totalorder %s45, %s46
    %p55 = scmp.eq.s32.totalorder %s14, 0
    %p56 = por %p54, %p55
    %p57 = scmp.ne.s32.totalorder %s45, %s46
    %p58 = scmp.eq.s32.totalorder %s15, 2
    %p59 = por %p57, %p58
    %p61 = scmp.ne.s32.totalorder %s46, %s60
    %p62 = scmp.eq.s32.totalorder %s15, 0
    %p63 = por %p61, %p62
    %s65 = sadd.s32 %s64, 1
    %p68 = scmp.eq.s32.totalorder %s9, 2
    %p69 = scmp.ne.s32.totalorder %s64, %s66
    %p70 = scmp.eq.s32.totalorder %s9, 0
    %p71 = por %p69, %p70
    %p72 = scmp.ne.s32.totalorder %s64, %s66
    %p73 = scmp.eq.s32.totalorder %s14, 2
    %p74 = por %p72, %p73
    %p75 = scmp.ne.s32.totalorder %s66, %s67
    %p76 = scmp.eq.s32.totalorder %s14, 0
    %p77 = por %p75, %p76
    %p78 = scmp.ne.s32.totalorder %s66, %s67
    %p79 = scmp.eq.s32.totalorder %s15, 2
    %p80 = por %p78, %p79
    %p82 = scmp.ne.s32.totalorder %s67, %s81
    %p83 = scmp.eq.s32.totalorder %s15, 0
    %p84 = por %p82, %p83
    %s85 = ssub.s32 %s9, %s16
    %p86 = scmp.eq.s32.totalorder %s85, 0
    %s88 = sadd.s32 %s87, 1
    %s89 = scalar_select %p86, %s87, %s88
    %p92 = pneg %p86
    %p93 = scmp.eq.s32.totalorder %s9, 2
    %p94 = por %p92, %p93
    %p95 = scmp.ne.s32.totalorder %s87, %s90
    %p96 = scmp.eq.s32.totalorder %s9, 0
    %p97 = por %p95, %p96
    %p98 = scmp.ne.s32.totalorder %s87, %s90
    %p99 = scmp.eq.s32.totalorder %s14, 2
    %p100 = por %p98, %p99
    %p101 = scmp.ne.s32.totalorder %s90, %s91
    %p102 = scmp.eq.s32.totalorder %s14, 0
    %p103 = por %p101, %p102
    %p104 = scmp.ne.s32.totalorder %s90, %s91
    %p105 = scmp.eq.s32.totalorder %s15, 2
    %p106 = por %p104, %p105
    %p108 = scmp.ne.s32.totalorder %s91, %s107
    %p109 = scmp.eq.s32.totalorder %s15, 0
    %p110 = por %p108, %p109
    %p111 = scmp.le.s32.totalorder 1, %s9
    %p112 = scmp.lt.s32.totalorder %s9, 4
    %p113 = pnand %p111, %p112
    %p114 = pneg %p113
    // Predicated region
    $region9: #{classify_decoder_forward.1} parent=5 // pred_check
      _
    $region10: #{classify_decoder_forward.1} parent=5 // pred_check_branch
      %116 = sbr.rel (%p113) target = $region12
    $region11: #{classify_decoder_forward.1} parent=5 // pred_region
      %s117 = ssub.s32 %s9, 1
      // Predicated region
      $region13: #{classify_decoder_forward.1} parent=11 // pred_check
        %p118 = pneg %p56
      $region14: #{classify_decoder_forward.1} parent=11 // pred_check_branch
        %120 = sbr.rel (%p118) target = $region16
      $region15: #{classify_decoder_forward.1} parent=11 // pred_region
        _
      $region16: #{classify_decoder_forward.1} parent=11 // pred_fallthru
        _
      // Predicated region
      $region17: #{classify_decoder_forward.1} parent=11 // pred_check
        %p121 = pneg %p77
      $region18: #{classify_decoder_forward.1} parent=11 // pred_check_branch
        %123 = sbr.rel (%p121) target = $region20
      $region19: #{classify_decoder_forward.1} parent=11 // pred_region
        _
      $region20: #{classify_decoder_forward.1} parent=11 // pred_fallthru
        _
    $region12: #{classify_decoder_forward.1} parent=5 // pred_fallthru
      _
    %p124 = scmp.lt.s32.totalorder %s9, 3
    // Predicated region
    $region21: #{classify_decoder_forward.1} parent=5 // pred_check
      %p125 = pneg %p124
    $region22: #{classify_decoder_forward.1} parent=5 // pred_check_branch
      %127 = sbr.rel (%p125) target = $region24
    $region23: #{classify_decoder_forward.1} parent=5 // pred_region
      // Predicated region
      $region25: #{classify_decoder_forward.1} parent=23 // pred_check
        %p128 = pneg %p29
      $region26: #{classify_decoder_forward.1} parent=23 // pred_check_branch
        %130 = sbr.rel (%p128) target = $region28
      $region27: #{classify_decoder_forward.1} parent=23 // pred_region
        %p131 = scmp.lt.s32.totalorder %s9, 2
        %s132 = scalar_select %p131, %s9, 2
        %s133 = smul.addr %s132, 8
        %s134 = scalar_lea.vmem %s0, %s133
      $region28: #{classify_decoder_forward.1} parent=23 // pred_fallthru
        _
    $region24: #{classify_decoder_forward.1} parent=5 // pred_fallthru
      _
    %p135 = scmp.le.s32.totalorder 1, %s9
    %p136 = scmp.lt.s32.totalorder %s9, 4
    %p137 = pnand %p135, %p136
    %p138 = pneg %p137
    // Predicated region
    $region29: #{classify_decoder_forward.1} parent=5 // pred_check
      _
    $region30: #{classify_decoder_forward.1} parent=5 // pred_check_branch
      %140 = sbr.rel (%p137) target = $region32
    $region31: #{classify_decoder_forward.1} parent=5 // pred_region
      %s141 = ssub.s32 %s9, 1
      %p142 = scmp.lt.s32.totalorder %s14, 2
      %s143 = scalar_select %p142, %s14, 2
      %s144 = smul.addr %s143, 8
      %s145 = scalar_lea.vmem %s0, %s144
      %p146 = pneg %p35
      %p147 = pneg %p32
      %p148 = pneg %p56
      %p149 = pneg %p53
      %p150 = pneg %p77
      %p151 = pneg %p74
      %p152 = pneg %p103
      %p153 = pneg %p100
      %p154 = scmp.lt.s32.totalorder %s14, 2
      %s155 = scalar_select %p154, %s14, 2
      %s156 = smul.addr %s155, 8
      %s157 = scalar_lea.vmem %s3, %s156
      %p158 = scmp.lt.s32.totalorder %s14, 2
      %s159 = scalar_select %p158, %s14, 2
      %s160 = smul.addr %s159, 8
      %s161 = scalar_lea.vmem %s0, %s160
      %p162 = scmp.lt.s32.totalorder %s14, 2
      %s163 = scalar_select %p162, %s14, 2
      %s164 = smul.addr %s163, 8
      %s165 = scalar_lea.vmem %s3, %s164
      %v166 = vld [vmem:[%s161] sm:$0xff]
      %v167 = vld [vmem:[%s1] sm:$0xff]
      %v168 = vld [vmem:[%s1 + $0x8] sm:$0xff]
      %v169 = vld [vmem:[%s1 + $0x10] sm:$0xff]
      %v170 = vld [vmem:[%s1 + $0x18] sm:$0xff]
      %v171 = vld [vmem:[%s2] sm:$0x1]
      %v173 = vlaneseq
      %v174 = vshrl.u32 %v173, 7
      %v175 = vsub.s32 0, %v174
      %v176 = vrot.slane %v171, %v175
      %vm178 = vcmask 261120
      %v180 = vsel %vm178, %v166, 0
      %182 = vmatprep.subr.mxu0 0.0
      %183 = vmatpush1.msra.mxu0 0.0
      %184 = vmatprep.subr.mxu0 0.0
      %185 = vmatpush1.msra.mxu0 0.0
      %186 = vmatprep.subr.mxu0 0.0
      %187 = vmatpush1.msra.mxu0 0.0
      %188 = vmatprep.subr.mxu0 0.0
      %189 = vmatpush1.msra.mxu0 0.0
      %190 = vmatprep.subr.mxu0 0.0
      %191 = vmatpush1.msra.mxu0 0.0
      %192 = vmatprep.subr.mxu0 0.0
      %193 = vmatpush1.msra.mxu0 0.0
      %194 = vmatprep.subr.mxu0 0.0
      %195 = vmatpush1.msra.mxu0 0.0
      %196 = vmatprep.subr.mxu0 0.0
      %197 = vmatpush1.msra.mxu0 0.0
      %198 = vmatprep.subr.mxu0 0.0
      %199 = vmatpush1.msra.mxu0 0.0
      %200 = vmatprep.subr.mxu0 0.0
      %201 = vmatpush1.msra.mxu0 0.0
      %202 = vmatprep.subr.mxu0 0.0
      %203 = vmatpush1.msra.mxu0 0.0
      %204 = vmatprep.subr.mxu0 0.0
      %205 = vmatpush1.msra.mxu0 0.0
      %206 = vmatprep.subr.mxu0 0.0
      %207 = vmatpush1.msra.mxu0 %v170
      %208 = vmatprep.subr.mxu0 0.0
      %209 = vmatpush1.msra.mxu0 %v169
      %210 = vmatprep.subr.mxu0 0.0
      %211 = vmatpush1.msra.mxu0 %v168
      %212 = vmatprep.subr.mxu0 0.0
      %213 = vmatpush1.msra.mxu0 %v167
      %214 = vmatprep.subr.mxu0 0.0
      %215 = vmatpush2.msra.mxu0 0.0
      %216 = vmatprep.subr.mxu0 0.0
      %217 = vmatpush2.msra.mxu0 0.0
      %218 = vmatprep.subr.mxu0 0.0
      %219 = vmatpush2.msra.mxu0 0.0
      %220 = vmatprep.subr.mxu0 0.0
      %221 = vmatpush2.msra.mxu0 0.0
      %222 = vmatprep.subr.mxu0 0.0
      %223 = vmatpush2.msra.mxu0 0.0
      %224 = vmatprep.subr.mxu0 0.0
      %225 = vmatpush2.msra.mxu0 0.0
      %226 = vmatprep.subr.mxu0 0.0
      %227 = vmatpush2.msra.mxu0 0.0
      %228 = vmatprep.subr.mxu0 0.0
      %229 = vmatpush2.msra.mxu0 0.0
      %230 = vmatprep.subr.mxu0 0.0
      %231 = vmatpush2.msra.mxu0 0.0
      %232 = vmatprep.subr.mxu0 0.0
      %233 = vmatpush2.msra.mxu0 0.0
      %234 = vmatprep.subr.mxu0 0.0
      %235 = vmatpush2.msra.mxu0 0.0
      %236 = vmatprep.subr.mxu0 0.0
      %237 = vmatpush2.msra.mxu0 0.0
      %238 = vmatprep.subr.mxu0 0.0
      %239 = vmatpush2.msra.mxu0 0.0
      %240 = vmatprep.subr.mxu0 0.0
      %241 = vmatpush2.msra.mxu0 0.0
      %242 = vmatprep.subr.mxu0 0.0
      %243 = vmatpush2.msra.mxu0 0.0
      %244 = vmatprep.subr.mxu0 0.0
      %245 = vmatpush2.msra.mxu0 0.0
      %246 = vmatprep.mubr.f32.mxu0 0.0
      %247 = vmatmul.mubr.f32.gmra.mxu0 %v180
      %v248 = vpop.f32.mrf.mxu0
      %v249 = vadd.f32 %v176, %v248
      %v250 = vpop.f32.mrf.mxu0
      %251 = vdwg.mxu0
      %vm252 = vcmask 15360
      %253 = vst.msk [vmem:[%s165] sm:$0xff] %vm252, %v249
      %p254 = scmp.lt.s32.totalorder %s14, 2
      %s255 = scalar_select %p254, %s14, 2
      %s256 = smul.addr %s255, 8
      %s257 = scalar_lea.vmem %s3, %s256
      // Predicated region
      $region33: #{classify_decoder_forward.1} parent=31 // pred_check
        %p258 = pneg %p100
      $region34: #{classify_decoder_forward.1} parent=31 // pred_check_branch
        %260 = sbr.rel (%p258) target = $region36
      $region35: #{classify_decoder_forward.1} parent=31 // pred_region
        _
      $region36: #{classify_decoder_forward.1} parent=31 // pred_fallthru
        _
    $region32: #{classify_decoder_forward.1} parent=5 // pred_fallthru
      _
    %p261 = scmp.le.s32.totalorder 2, %s9
    // Predicated region
    $region37: #{classify_decoder_forward.1} parent=5 // pred_check
      %p262 = pneg %p261
    $region38: #{classify_decoder_forward.1} parent=5 // pred_check_branch
      %264 = sbr.rel (%p262) target = $region40
    $region39: #{classify_decoder_forward.1} parent=5 // pred_region
      %s265 = ssub.s32 %s9, 2
      // Predicated region
      $region41: #{classify_decoder_forward.1} parent=39 // pred_check
        %p266 = pneg %p106
      $region42: #{classify_decoder_forward.1} parent=39 // pred_check_branch
        %268 = sbr.rel (%p266) target = $region44
      $region43: #{classify_decoder_forward.1} parent=39 // pred_region
        %p269 = scmp.lt.s32.totalorder %s15, 2
        %s270 = scalar_select %p269, %s15, 2
        %s271 = smul.addr %s270, 8
        %s272 = scalar_lea.vmem %s3, %s271
      $region44: #{classify_decoder_forward.1} parent=39 // pred_fallthru
        _
    $region40: #{classify_decoder_forward.1} parent=5 // pred_fallthru
      _
  $region6: #{classify_decoder_forward.1} parent=0 // loop_footer
    %s13 = sadd.s32 1, %s9
  $region7: #{classify_decoder_forward.1} parent=0 // loop_footer_branch
    %8 = sbr.rel target = $region3
  $region8: #{classify_decoder_forward.1} parent=0 // loop_exit
    _

</llo_original>
